<compile_context>
chip_gen: v7x
topology: tpu7x:2x2x1
jax: 0.10.0
libtpu: 0.0.40
codegen_flags: <defaults>
</compile_context>

<pallas_src>
import functools

import jax
import jax.numpy as jnp
from jax.experimental import pallas as pl
from jax.experimental.pallas import tpu as pltpu

MAX_WH = 640.0
OUT_COLS = 6             # [x1, y1, x2, y2, objScore, objCls]
DEFAULT_MAX_TILE = 4096  # anchors (sublanes) per grid step
CHUNK = 256              # anchors per in-kernel working chunk (bounds live vregs)


def _round_up(a, b):
    return (a + b - 1) // b * b


def _onnx_ort_kernel(x_ref, out_ref, *, chunk):
    # x_ref:   (TM, D) f32 -- rows = anchors, lanes = [cx, cy, w, h, conf, cls_0..cls_{C-1}]
    # out_ref: (TM, 6) f32 -- lanes = [x1, y1, x2, y2, objScore, objCls]
    tm, d = x_ref.shape
    n_chunks = tm // chunk

    def body(ci, carry):
        s = pl.multiple_of(ci * chunk, chunk)
        xc = x_ref[pl.ds(s, chunk), :]                        # (chunk, D)

        # xywh -> xyxy: exact f32 VPU arithmetic (no MXU / convert-matrix stream).
        cxy = xc[:, 0:2]                                      # [cx, cy]
        half = 0.5 * xc[:, 2:4]                               # [w/2, h/2]
        out_ref[pl.ds(s, chunk), pl.ds(0, 2)] = cxy - half    # [x1, y1]
        out_ref[pl.ds(s, chunk), pl.ds(2, 2)] = cxy + half    # [x2, y2]

        # Class max / first-occurrence argmax over the lane axis (XLU reduce).
        # conf multiply kept here (one full-tile VPU op) so semantics match
        # max(score * conf) / argmax(score * conf) exactly, including conf == 0.
        conf = xc[:, 4:5]                                     # (chunk, 1)
        lane = jax.lax.broadcasted_iota(jnp.int32, (chunk, d), 1)
        scores = jnp.where(lane >= 5, xc * conf, -jnp.inf)    # mask non-class lanes
        best = jnp.max(scores, axis=1, keepdims=True)         # (chunk, 1)
        lane_f = lane.astype(jnp.float32)
        first = jnp.min(jnp.where(scores == best, lane_f, jnp.float32(d)),
                        axis=1, keepdims=True)                # first occurrence of max
        cls = first - 5.0                                     # float class id (C << 2^24 -> exact)
        out_ref[pl.ds(s, chunk), pl.ds(4, 1)] = best
        out_ref[pl.ds(s, chunk), pl.ds(5, 1)] = cls
        return carry

    jax.lax.fori_loop(0, n_chunks, body, 0, unroll=False)


def onnx_ort_preprocess_packed(x, max_tile=DEFAULT_MAX_TILE):
    """Pallas hot path.  x: (B, N, 5+C) f32 -> packed (B*N, 6) f32
    with columns [x1, y1, x2, y2, objScore, objCls] in the natural row-major layout."""
    b, n, d = x.shape
    c = d - 5
    assert c >= 1, "ONNX_ORT requires at least one class channel (D >= 6)"

    m = b * n
    x2 = x.reshape(m, d)                       # contiguous reshape: no extra HBM pass

    # >= 2 grid steps when possible (v7x has two TensorCores); tile is a multiple of
    # CHUNK (hence of 8 sublanes) and capped so double-buffered in+out tiles stay well
    # inside v5e's 16 MiB scoped-VMEM default.  Raise max_tile on v6e if desired.
    n_steps = max(2, pl.cdiv(m, max_tile))
    tm = _round_up(pl.cdiv(m, n_steps), CHUNK)
    grid = pl.cdiv(m, tm)
    m_pad = grid * tm
    assert tm % CHUNK == 0
    if m_pad != m:                             # rare; costs one extra copy of x
        x2 = jnp.pad(x2, ((0, m_pad - m), (0, 0)))

    packed = pl.pallas_call(
        functools.partial(_onnx_ort_kernel, chunk=CHUNK),
        out_shape=jax.ShapeDtypeStruct((m_pad, OUT_COLS), jnp.float32),
        grid=(grid,),
        in_specs=[pl.BlockSpec((tm, d), lambda i: (i, 0))],
        out_specs=pl.BlockSpec((tm, OUT_COLS), lambda i: (i, 0)),
        compiler_params=pltpu.CompilerParams(
            dimension_semantics=("parallel",)),
    )(x2)
    return packed[:m]


def onnx_ort_preprocess(x, max_tile=DEFAULT_MAX_TILE):
    """Unpacked (box, nmsbox, objScore, objCls) view for validation only.  The hot path
    (onnx_ort_forward) keeps the packed layout and never materializes these arrays."""
    b, n, _ = x.shape
    p = onnx_ort_preprocess_packed(x, max_tile).reshape(b, n, OUT_COLS)
    box = p[..., 0:4]
    obj_score = p[..., 4:5]
    obj_cls = p[..., 5:6]
    nmsbox = box + obj_cls * MAX_WH            # pure redundancy, kept out of the kernel
    return box, nmsbox, obj_score, obj_cls


def onnx_ort_forward(x, key, max_obj=100):
    b, n, _ = x.shape
    packed = onnx_ort_preprocess_packed(x)     # (B*N, 6)

    # --- ORT_NMS placeholder ---------------------------------------------
    # The PyTorch ORT_NMS.forward is a random stub standing in for the ONNX
    # NonMaxSuppression node at export time (it ignores nmsbox / objScore).
    # Reproduced here deterministically with a JAX PRNG, host-side (not jitted).
    # TODO(synk): a real IoU-based NonMaxSuppression over nmsbox/objScore is not part
    # of the reference forward semantics and is not implemented here.
    k1, k2 = jax.random.split(key)
    hi = min(max_obj, max(n - 100, 0))
    num_det = int(jax.random.randint(k1, (), 0, hi + 1))
    sel_batch = jnp.sort(jax.random.randint(k2, (num_det,), 0, b))
    sel_anchor = jnp.arange(100, 100 + num_det)   # same convention as the torch stub

    sel = packed[sel_batch * n + sel_anchor]   # gather of <= 100 packed rows, no transposes
    res_boxes = sel[:, 0:4]
    res_scores = sel[:, 4:5]
    res_classes = sel[:, 5:6]
    return jnp.concatenate(
        [sel_batch[:, None].astype(jnp.float32), res_boxes, res_classes, res_scores],
        axis=1,
    )                                          # (num_det, 7)


def _reference_preprocess(x, cm):
    box = x[:, :, :4]
    conf = x[:, :, 4:5]
    score = x[:, :, 5:] * conf
    box_c = jnp.einsum("bnk,kj->bnj", box, cm, precision="highest")
    obj_score = jnp.max(score, axis=2, keepdims=True)
    obj_cls = jnp.argmax(score, axis=2, keepdims=True).astype(jnp.float32)
    nmsbox = box_c + obj_cls * MAX_WH
    return box_c, nmsbox, obj_score, obj_cls


if __name__ == "__main__":
    key = jax.random.PRNGKey(0)
    kx, knms = jax.random.split(key)

    B, N, C = 2, 256, 80                       # batch, anchors, classes (small, YOLO-like)
    x = jax.random.uniform(kx, (B, N, 5 + C), dtype=jnp.float32)

    convert_matrix = jnp.array(
        [[1.0, 0.0, 1.0, 0.0],
         [0.0, 1.0, 0.0, 1.0],
         [-0.5, 0.0, 0.5, 0.0],
         [0.0, -0.5, 0.0, 0.5]], dtype=jnp.float32)

    # Sanity-check the Pallas hot path against the original matmul/max formulation.
    box_k, nmsbox_k, score_k, cls_k = jax.block_until_ready(onnx_ort_preprocess(x))
    box_r, nmsbox_r, score_r, cls_r = _reference_preprocess(x, convert_matrix)
    assert jnp.allclose(box_k, box_r, atol=1e-5)
    assert jnp.allclose(cls_k, cls_r)
    assert jnp.allclose(score_k, score_r, atol=1e-6)
    assert jnp.allclose(nmsbox_k, nmsbox_r, atol=1e-4)

    out = onnx_ort_forward(x, knms)
    jax.block_until_ready(out)
    assert out.ndim == 2 and out.shape[1] == 7

    print("KERNEL_OK")
</pallas_src>

<mosaic_0001>
module attributes {stable_mosaic.version = 11 : i64} {
  func.func @_onnx_ort_kernel(%arg0: i32, %arg1: memref<256x85xf32, #tpu.memory_space<vmem>>, %arg2: memref<256x6xf32, #tpu.memory_space<vmem>>) attributes {dimension_semantics = [#tpu.dimension_semantics<parallel>], iteration_bounds = array<i64: 2>, scalar_prefetch = 0 : i64, scratch_operands = 0 : i64, tpu.core_type = #tpu.core_type<tc>, window_params = [{transform_indices = @transform_0, window_bounds = array<i64: 256, 85>}, {transform_indices = @transform_1, window_bounds = array<i64: 256, 6>}]} {
    %c0_i32 = arith.constant 0 : i32
    %c256_i32 = arith.constant 256 : i32
    %0 = arith.muli %c0_i32, %c256_i32 : i32
    %1 = tpu.assume_multiple %0, 256 : i32
    %2 = arith.index_cast %1 : i32 to index
    %c0 = arith.constant 0 : index
    %3 = vector.load %arg1[%2, %c0] : memref<256x85xf32, #tpu.memory_space<vmem>>, vector<256x85xf32>
    %4 = vector.extract_strided_slice %3 {offsets = [0, 0], sizes = [256, 2], strides = [1, 1]} : vector<256x85xf32> to vector<256x2xf32>
    %5 = vector.extract_strided_slice %3 {offsets = [0, 2], sizes = [256, 2], strides = [1, 1]} : vector<256x85xf32> to vector<256x2xf32>
    %cst = arith.constant 5.000000e-01 : f32
    %6 = vector.broadcast %cst : f32 to vector<256x2xf32>
    %7 = arith.mulf %6, %5 : vector<256x2xf32>
    %8 = arith.subf %4, %7 : vector<256x2xf32>
    %9 = arith.index_cast %1 : i32 to index
    %c0_0 = arith.constant 0 : index
    %10 = vector.load %arg2[%9, %c0_0] : memref<256x6xf32, #tpu.memory_space<vmem>>, vector<256x2xf32>
    tpu.vector_store %arg2[%9, %c0_0], %8 {strides = array<i32>} : memref<256x6xf32, #tpu.memory_space<vmem>>, vector<256x2xf32>,
    %11 = arith.addf %4, %7 : vector<256x2xf32>
    %12 = arith.index_cast %1 : i32 to index
    %c2 = arith.constant 2 : index
    %13 = vector.load %arg2[%12, %c2] : memref<256x6xf32, #tpu.memory_space<vmem>>, vector<256x2xf32>
    tpu.vector_store %arg2[%12, %c2], %11 {strides = array<i32>} : memref<256x6xf32, #tpu.memory_space<vmem>>, vector<256x2xf32>,
    %14 = vector.extract_strided_slice %3 {offsets = [0, 4], sizes = [256, 1], strides = [1, 1]} : vector<256x85xf32> to vector<256x1xf32>
    %15 = tpu.iota {dimensions = array<i32: 1>} : vector<256x85xi32>
    %c5_i32 = arith.constant 5 : i32
    %16 = vector.broadcast %c5_i32 : i32 to vector<256x85xi32>
    %17 = arith.cmpi sge, %15, %16 : vector<256x85xi32>
    %18 = vector.broadcast %14 : vector<256x1xf32> to vector<256x85xf32>
    %19 = arith.mulf %3, %18 : vector<256x85xf32>
    %cst_1 = arith.constant 0xFF800000 : f32
    %20 = vector.broadcast %cst_1 : f32 to vector<256x85xf32>
    %21 = arith.select %17, %19, %20 : vector<256x85xi1>, vector<256x85xf32>
    %cst_2 = arith.constant dense<0xFF800000> : vector<256xf32>
    %22 = vector.multi_reduction <maximumf>, %21, %cst_2 [1] : vector<256x85xf32> to vector<256xf32>
    %23 = vector.shape_cast %22 : vector<256xf32> to vector<256x1xf32>
    %24 = arith.sitofp %15 : vector<256x85xi32> to vector<256x85xf32>
    %25 = vector.broadcast %23 : vector<256x1xf32> to vector<256x85xf32>
    %26 = arith.cmpf oeq, %21, %25 : vector<256x85xf32>
    %cst_3 = arith.constant 8.500000e+01 : f32
    %27 = vector.broadcast %cst_3 : f32 to vector<256x85xf32>
    %28 = arith.select %26, %24, %27 : vector<256x85xi1>, vector<256x85xf32>
    %cst_4 = arith.constant dense<0x7F800000> : vector<256xf32>
    %29 = vector.multi_reduction <minimumf>, %28, %cst_4 [1] : vector<256x85xf32> to vector<256xf32>
    %30 = vector.shape_cast %29 : vector<256xf32> to vector<256x1xf32>
    %cst_5 = arith.constant 5.000000e+00 : f32
    %31 = vector.broadcast %cst_5 : f32 to vector<256x1xf32>
    %32 = arith.subf %30, %31 : vector<256x1xf32>
    %33 = arith.index_cast %1 : i32 to index
    %c4 = arith.constant 4 : index
    %34 = vector.load %arg2[%33, %c4] : memref<256x6xf32, #tpu.memory_space<vmem>>, vector<256x1xf32>
    tpu.vector_store %arg2[%33, %c4], %23 {strides = array<i32>} : memref<256x6xf32, #tpu.memory_space<vmem>>, vector<256x1xf32>,
    %35 = arith.index_cast %1 : i32 to index
    %c5 = arith.constant 5 : index
    %36 = vector.load %arg2[%35, %c5] : memref<256x6xf32, #tpu.memory_space<vmem>>, vector<256x1xf32>
    tpu.vector_store %arg2[%35, %c5], %32 {strides = array<i32>} : memref<256x6xf32, #tpu.memory_space<vmem>>, vector<256x1xf32>,
    %c1_i32 = arith.constant 1 : i32
    return
  }
  func.func @transform_0(%arg0: i32) -> (i32, i32) {
    %c0_i32 = arith.constant 0 : i32
    %c0_i32_0 = arith.constant 0 : i32
    return %arg0, %c0_i32 : i32, i32
  }
  func.func @transform_1(%arg0: i32) -> (i32, i32) {
    %c0_i32 = arith.constant 0 : i32
    %c0_i32_0 = arith.constant 0 : i32
    return %arg0, %c0_i32 : i32, i32
  }
}

</mosaic_0001>

<llo_original>
// kernel: tpu_custom_call.1
$region0: #{tpu_custom_call.1}
  #allocation0 [shape = 'u32[]', space=smem, size = 0x4, offset = 0x4, fixed_abs, tag = 'smem constant byte address 0x4 - core index']
  #allocation1 [shape = 'u32[144,128]{1,0:T(1,128)}', space=vmem, size = 0x12000, scoped, tag = 'internal scratch']
  %s0 = inlined_call_operand.vmem [shape: f32[512,85], index: 0, kind: input, shape index: {}]
  %s1 = inlined_call_operand.vmem [shape: f32[512,6], index: 1, kind: output, shape index: {}]
  %s2 = sld [smem:[#allocation0]]
  $region37: #{tpu_custom_call.1} parent=0
    _
  %s4 = ssub.s32 1, %s2
  %s5 = scalar_select 0, %s4, %s2
  loop: start=0, step=1, limit=4
  $region2: #{tpu_custom_call.1} parent=0 // loop_pre_header
    _
  $region3: #{tpu_custom_call.1} parent=0 // loop_header
    %s7 = sphi 0, %s11
    %p8 = scmp.ge.s32.totalorder %s7, 4
    %s17 = sphi 0, %s19
    %s20 = sphi 0, %s17
    %s21 = sphi 0, %s20
    %s37 = sphi 0, %s21
    %s43 = sphi 0, %s45
    %s46 = sphi 0, %s43
    %s47 = sphi 0, %s46
    %s63 = sphi 0, %s47
  $region4: #{tpu_custom_call.1} parent=0 // loop_header_branch
    %10 = sbr.rel (%p8) target = $region8
  $region5: #{tpu_custom_call.1} parent=0 // loop_body
    %s12 = ssub.s32 %s7, 1
    %s13 = ssub.s32 %s7, 2
    %s14 = sadd.s32 %s7, 1
    %s15 = ssub.s32 %s7, %s14
    %p16 = scmp.eq.s32.totalorder %s15, 0
    %s18 = sadd.s32 %s17, 1
    %s19 = scalar_select %p16, %s17, %s18
    %p22 = pneg %p16
    %p23 = scmp.eq.s32.totalorder %s7, 1
    %p24 = por %p22, %p23
    %p25 = scmp.ne.s32.totalorder %s17, %s20
    %p26 = scmp.eq.s32.totalorder %s7, 0
    %p27 = por %p25, %p26
    %p28 = scmp.ne.s32.totalorder %s17, %s20
    %p29 = scmp.eq.s32.totalorder %s12, 1
    %p30 = por %p28, %p29
    %p31 = scmp.ne.s32.totalorder %s20, %s21
    %p32 = scmp.eq.s32.totalorder %s12, 0
    %p33 = por %p31, %p32
    %p34 = scmp.ne.s32.totalorder %s20, %s21
    %p35 = scmp.eq.s32.totalorder %s13, 1
    %p36 = por %p34, %p35
    %p38 = scmp.ne.s32.totalorder %s21, %s37
    %p39 = scmp.eq.s32.totalorder %s13, 0
    %p40 = por %p38, %p39
    %s41 = ssub.s32 %s7, %s14
    %p42 = scmp.eq.s32.totalorder %s41, 0
    %s44 = sadd.s32 %s43, 1
    %s45 = scalar_select %p42, %s43, %s44
    %p48 = pneg %p42
    %p49 = scmp.eq.s32.totalorder %s7, 1
    %p50 = por %p48, %p49
    %p51 = scmp.ne.s32.totalorder %s43, %s46
    %p52 = scmp.eq.s32.totalorder %s7, 0
    %p53 = por %p51, %p52
    %p54 = scmp.ne.s32.totalorder %s43, %s46
    %p55 = scmp.eq.s32.totalorder %s12, 1
    %p56 = por %p54, %p55
    %p57 = scmp.ne.s32.totalorder %s46, %s47
    %p58 = scmp.eq.s32.totalorder %s12, 0
    %p59 = por %p57, %p58
    %p60 = scmp.ne.s32.totalorder %s46, %s47
    %p61 = scmp.eq.s32.totalorder %s13, 1
    %p62 = por %p60, %p61
    %p64 = scmp.ne.s32.totalorder %s47, %s63
    %p65 = scmp.eq.s32.totalorder %s13, 0
    %p66 = por %p64, %p65
    %p67 = scmp.le.s32.totalorder 1, %s7
    %p68 = scmp.lt.s32.totalorder %s7, 3
    %p69 = pnand %p67, %p68
    %p70 = pneg %p69
    // Predicated region
    $region9: #{tpu_custom_call.1} parent=5 // pred_check
      _
    $region10: #{tpu_custom_call.1} parent=5 // pred_check_branch
      %72 = sbr.rel (%p69) target = $region12
    $region11: #{tpu_custom_call.1} parent=5 // pred_region
      %s73 = ssub.s32 %s7, 1
    $region12: #{tpu_custom_call.1} parent=5 // pred_fallthru
      _
    %p74 = scmp.lt.s32.totalorder %s7, 2
    // Predicated region
    $region13: #{tpu_custom_call.1} parent=5 // pred_check
      %p75 = pneg %p74
    $region14: #{tpu_custom_call.1} parent=5 // pred_check_branch
      %77 = sbr.rel (%p75) target = $region16
    $region15: #{tpu_custom_call.1} parent=5 // pred_region
      // Predicated region
      $region17: #{tpu_custom_call.1} parent=15 // pred_check
        %p78 = pneg %p27
      $region18: #{tpu_custom_call.1} parent=15 // pred_check_branch
        %80 = sbr.rel (%p78) target = $region20
      $region19: #{tpu_custom_call.1} parent=15 // pred_region
        %s81 = smul.u32 32, %s7
        %p82 = scmp.lt.s32.totalorder %s81, 63
        %s83 = scalar_select %p82, %s81, 63
        %s84 = smul.addr %s83, 8
        %s85 = scalar_lea.vmem %s0, %s84
        %s86 = smul.u32 32, %s7
      $region20: #{tpu_custom_call.1} parent=15 // pred_fallthru
        _
    $region16: #{tpu_custom_call.1} parent=5 // pred_fallthru
      _
    %p87 = scmp.le.s32.totalorder 1, %s7
    %p88 = scmp.lt.s32.totalorder %s7, 3
    %p89 = pnand %p87, %p88
    %p90 = pneg %p89
    // Predicated region
    $region21: #{tpu_custom_call.1} parent=5 // pred_check
      _
    $region22: #{tpu_custom_call.1} parent=5 // pred_check_branch
      %92 = sbr.rel (%p89) target = $region24
    $region23: #{tpu_custom_call.1} parent=5 // pred_region
      %s93 = ssub.s32 %s7, 1
      %s94 = smul.u32 32, %s12
      %p95 = scmp.lt.s32.totalorder %s94, 63
      %s96 = scalar_select %p95, %s94, 63
      %s97 = smul.addr %s96, 8
      %s98 = scalar_lea.vmem %s0, %s97
      %p99 = pneg %p33
      %p100 = pneg %p30
      %p101 = pneg %p59
      %p102 = pneg %p56
      %s103 = smul.u32 32, %s12
      %p104 = scmp.lt.s32.totalorder %s103, 63
      %s105 = scalar_select %p104, %s103, 63
      %s106 = smul.addr %s105, 8
      %s107 = scalar_lea.vmem %s1, %s106
      %s108 = smul.u32 32, %s12
      %p109 = scmp.lt.s32.totalorder %s108, 63
      %s110 = scalar_select %p109, %s108, 63
      %s111 = smul.addr %s110, 8
      %s112 = scalar_lea.vmem %s0, %s111
      %s113 = smul.u32 32, %s12
      %s114 = smul.u32 32, %s12
      %p115 = scmp.lt.s32.totalorder %s114, 63
      %s116 = scalar_select %p115, %s114, 63
      %s117 = smul.addr %s116, 8
      %s118 = scalar_lea.vmem %s1, %s117
      %s119 = smul.u32 32, %s12
      %v120 = vld [vmem:[%s112] sm:$0xff]
      %v121 = vld [vmem:[%s112 + $0x8] sm:$0xff]
      %v122 = vld [vmem:[%s112 + $0x10] sm:$0xff]
      %v123 = vld [vmem:[%s112 + $0x18] sm:$0xff]
      %v124 = vld [vmem:[%s112 + $0x20] sm:$0xff]
      %v125 = vld [vmem:[%s112 + $0x28] sm:$0xff]
      %v126 = vld [vmem:[%s112 + $0x30] sm:$0xff]
      %v127 = vld [vmem:[%s112 + $0x38] sm:$0xff]
      %v128 = vld [vmem:[%s112 + $0x40] sm:$0xff]
      %v129 = vld [vmem:[%s112 + $0x48] sm:$0xff]
      %v130 = vld [vmem:[%s112 + $0x50] sm:$0xff]
      %v131 = vld [vmem:[%s112 + $0x58] sm:$0xff]
      %v132 = vld [vmem:[%s112 + $0x60] sm:$0xff]
      %v133 = vld [vmem:[%s112 + $0x68] sm:$0xff]
      %v134 = vld [vmem:[%s112 + $0x70] sm:$0xff]
      %v135 = vld [vmem:[%s112 + $0x78] sm:$0xff]
      %v136 = vld [vmem:[%s112 + $0x80] sm:$0xff]
      %v137 = vld [vmem:[%s112 + $0x88] sm:$0xff]
      %v138 = vld [vmem:[%s112 + $0x90] sm:$0xff]
      %v139 = vld [vmem:[%s112 + $0x98] sm:$0xff]
      %v140 = vld [vmem:[%s112 + $0xa0] sm:$0xff]
      %v141 = vld [vmem:[%s112 + $0xa8] sm:$0xff]
      %v142 = vld [vmem:[%s112 + $0xb0] sm:$0xff]
      %v143 = vld [vmem:[%s112 + $0xb8] sm:$0xff]
      %v144 = vld [vmem:[%s112 + $0xc0] sm:$0xff]
      %v145 = vld [vmem:[%s112 + $0xc8] sm:$0xff]
      %v146 = vld [vmem:[%s112 + $0xd0] sm:$0xff]
      %v147 = vld [vmem:[%s112 + $0xd8] sm:$0xff]
      %v148 = vld [vmem:[%s112 + $0xe0] sm:$0xff]
      %v149 = vld [vmem:[%s112 + $0xe8] sm:$0xff]
      %v150 = vld [vmem:[%s112 + $0xf0] sm:$0xff]
      %v151 = vld [vmem:[%s112 + $0xf8] sm:$0xff]
      %v152 = vmul.f32 %v120, 0.5
      %v153 = vmul.f32 %v121, 0.5
      %v154 = vmul.f32 %v122, 0.5
      %v155 = vmul.f32 %v123, 0.5
      %v156 = vmul.f32 %v124, 0.5
      %v157 = vmul.f32 %v125, 0.5
      %v158 = vmul.f32 %v126, 0.5
      %v159 = vmul.f32 %v127, 0.5
      %v160 = vmul.f32 %v128, 0.5
      %v161 = vmul.f32 %v129, 0.5
      %v162 = vmul.f32 %v130, 0.5
      %v163 = vmul.f32 %v131, 0.5
      %v164 = vmul.f32 %v132, 0.5
      %v165 = vmul.f32 %v133, 0.5
      %v166 = vmul.f32 %v134, 0.5
      %v167 = vmul.f32 %v135, 0.5
      %v168 = vmul.f32 %v136, 0.5
      %v169 = vmul.f32 %v137, 0.5
      %v170 = vmul.f32 %v138, 0.5
      %v171 = vmul.f32 %v139, 0.5
      %v172 = vmul.f32 %v140, 0.5
      %v173 = vmul.f32 %v141, 0.5
      %v174 = vmul.f32 %v142, 0.5
      %v175 = vmul.f32 %v143, 0.5
      %v176 = vmul.f32 %v144, 0.5
      %v177 = vmul.f32 %v145, 0.5
      %v178 = vmul.f32 %v146, 0.5
      %v179 = vmul.f32 %v147, 0.5
      %v180 = vmul.f32 %v148, 0.5
      %v181 = vmul.f32 %v149, 0.5
      %v182 = vmul.f32 %v150, 0.5
      %v183 = vmul.f32 %v151, 0.5
      %216 = vrot.lane.b32.xlu0 %v152, 126
      %v217 = vpop.permute.xlu0 %216
      %218 = vrot.lane.b32.xlu0 %v153, 126
      %v219 = vpop.permute.xlu0 %218
      %220 = vrot.lane.b32.xlu0 %v154, 126
      %v221 = vpop.permute.xlu0 %220
      %222 = vrot.lane.b32.xlu0 %v155, 126
      %v223 = vpop.permute.xlu0 %222
      %224 = vrot.lane.b32.xlu0 %v156, 126
      %v225 = vpop.permute.xlu0 %224
      %226 = vrot.lane.b32.xlu0 %v157, 126
      %v227 = vpop.permute.xlu0 %226
      %228 = vrot.lane.b32.xlu0 %v158, 126
      %v229 = vpop.permute.xlu0 %228
      %230 = vrot.lane.b32.xlu0 %v159, 126
      %v231 = vpop.permute.xlu0 %230
      %232 = vrot.lane.b32.xlu0 %v160, 126
      %v233 = vpop.permute.xlu0 %232
      %234 = vrot.lane.b32.xlu0 %v161, 126
      %v235 = vpop.permute.xlu0 %234
      %236 = vrot.lane.b32.xlu0 %v162, 126
      %v237 = vpop.permute.xlu0 %236
      %238 = vrot.lane.b32.xlu0 %v163, 126
      %v239 = vpop.permute.xlu0 %238
      %240 = vrot.lane.b32.xlu0 %v164, 126
      %v241 = vpop.permute.xlu0 %240
      %242 = vrot.lane.b32.xlu0 %v165, 126
      %v243 = vpop.permute.xlu0 %242
      %244 = vrot.lane.b32.xlu0 %v166, 126
      %v245 = vpop.permute.xlu0 %244
      %246 = vrot.lane.b32.xlu0 %v167, 126
      %v247 = vpop.permute.xlu0 %246
      %248 = vrot.lane.b32.xlu0 %v168, 126
      %v249 = vpop.permute.xlu0 %248
      %250 = vrot.lane.b32.xlu0 %v169, 126
      %v251 = vpop.permute.xlu0 %250
      %252 = vrot.lane.b32.xlu0 %v170, 126
      %v253 = vpop.permute.xlu0 %252
      %254 = vrot.lane.b32.xlu0 %v171, 126
      %v255 = vpop.permute.xlu0 %254
      %256 = vrot.lane.b32.xlu0 %v172, 126
      %v257 = vpop.permute.xlu0 %256
      %258 = vrot.lane.b32.xlu0 %v173, 126
      %v259 = vpop.permute.xlu0 %258
      %260 = vrot.lane.b32.xlu0 %v174, 126
      %v261 = vpop.permute.xlu0 %260
      %262 = vrot.lane.b32.xlu0 %v175, 126
      %v263 = vpop.permute.xlu0 %262
      %264 = vrot.lane.b32.xlu0 %v176, 126
      %v265 = vpop.permute.xlu0 %264
      %266 = vrot.lane.b32.xlu0 %v177, 126
      %v267 = vpop.permute.xlu0 %266
      %268 = vrot.lane.b32.xlu0 %v178, 126
      %v269 = vpop.permute.xlu0 %268
      %270 = vrot.lane.b32.xlu0 %v179, 126
      %v271 = vpop.permute.xlu0 %270
      %272 = vrot.lane.b32.xlu0 %v180, 126
      %v273 = vpop.permute.xlu0 %272
      %274 = vrot.lane.b32.xlu0 %v181, 126
      %v275 = vpop.permute.xlu0 %274
      %276 = vrot.lane.b32.xlu0 %v182, 126
      %v277 = vpop.permute.xlu0 %276
      %278 = vrot.lane.b32.xlu0 %v183, 126
      %v279 = vpop.permute.xlu0 %278
      %v312 = vsub.f32 %v120, %v217
      %v313 = vsub.f32 %v121, %v219
      %v314 = vsub.f32 %v122, %v221
      %v315 = vsub.f32 %v123, %v223
      %v316 = vsub.f32 %v124, %v225
      %v317 = vsub.f32 %v125, %v227
      %v318 = vsub.f32 %v126, %v229
      %v319 = vsub.f32 %v127, %v231
      %v320 = vsub.f32 %v128, %v233
      %v321 = vsub.f32 %v129, %v235
      %v322 = vsub.f32 %v130, %v237
      %v323 = vsub.f32 %v131, %v239
      %v324 = vsub.f32 %v132, %v241
      %v325 = vsub.f32 %v133, %v243
      %v326 = vsub.f32 %v134, %v245
      %v327 = vsub.f32 %v135, %v247
      %v328 = vsub.f32 %v136, %v249
      %v329 = vsub.f32 %v137, %v251
      %v330 = vsub.f32 %v138, %v253
      %v331 = vsub.f32 %v139, %v255
      %v332 = vsub.f32 %v140, %v257
      %v333 = vsub.f32 %v141, %v259
      %v334 = vsub.f32 %v142, %v261
      %v335 = vsub.f32 %v143, %v263
      %v336 = vsub.f32 %v144, %v265
      %v337 = vsub.f32 %v145, %v267
      %v338 = vsub.f32 %v146, %v269
      %v339 = vsub.f32 %v147, %v271
      %v340 = vsub.f32 %v148, %v273
      %v341 = vsub.f32 %v149, %v275
      %v342 = vsub.f32 %v150, %v277
      %v343 = vsub.f32 %v151, %v279
      %vm344 = vcmask 15360
      %345 = vst.msk [vmem:[%s118] sm:$0xff] %vm344, %v312
      %346 = vst.msk [vmem:[%s118 + $0x8] sm:$0xff] %vm344, %v313
      %347 = vst.msk [vmem:[%s118 + $0x10] sm:$0xff] %vm344, %v314
      %348 = vst.msk [vmem:[%s118 + $0x18] sm:$0xff] %vm344, %v315
      %349 = vst.msk [vmem:[%s118 + $0x20] sm:$0xff] %vm344, %v316
      %350 = vst.msk [vmem:[%s118 + $0x28] sm:$0xff] %vm344, %v317
      %351 = vst.msk [vmem:[%s118 + $0x30] sm:$0xff] %vm344, %v318
      %352 = vst.msk [vmem:[%s118 + $0x38] sm:$0xff] %vm344, %v319
      %353 = vst.msk [vmem:[%s118 + $0x40] sm:$0xff] %vm344, %v320
      %354 = vst.msk [vmem:[%s118 + $0x48] sm:$0xff] %vm344, %v321
      %355 = vst.msk [vmem:[%s118 + $0x50] sm:$0xff] %vm344, %v322
      %356 = vst.msk [vmem:[%s118 + $0x58] sm:$0xff] %vm344, %v323
      %357 = vst.msk [vmem:[%s118 + $0x60] sm:$0xff] %vm344, %v324
      %358 = vst.msk [vmem:[%s118 + $0x68] sm:$0xff] %vm344, %v325
      %359 = vst.msk [vmem:[%s118 + $0x70] sm:$0xff] %vm344, %v326
      %360 = vst.msk [vmem:[%s118 + $0x78] sm:$0xff] %vm344, %v327
      %361 = vst.msk [vmem:[%s118 + $0x80] sm:$0xff] %vm344, %v328
      %362 = vst.msk [vmem:[%s118 + $0x88] sm:$0xff] %vm344, %v329
      %363 = vst.msk [vmem:[%s118 + $0x90] sm:$0xff] %vm344, %v330
      %364 = vst.msk [vmem:[%s118 + $0x98] sm:$0xff] %vm344, %v331
      %365 = vst.msk [vmem:[%s118 + $0xa0] sm:$0xff] %vm344, %v332
      %366 = vst.msk [vmem:[%s118 + $0xa8] sm:$0xff] %vm344, %v333
      %367 = vst.msk [vmem:[%s118 + $0xb0] sm:$0xff] %vm344, %v334
      %368 = vst.msk [vmem:[%s118 + $0xb8] sm:$0xff] %vm344, %v335
      %369 = vst.msk [vmem:[%s118 + $0xc0] sm:$0xff] %vm344, %v336
      %370 = vst.msk [vmem:[%s118 + $0xc8] sm:$0xff] %vm344, %v337
      %371 = vst.msk [vmem:[%s118 + $0xd0] sm:$0xff] %vm344, %v338
      %372 = vst.msk [vmem:[%s118 + $0xd8] sm:$0xff] %vm344, %v339
      %373 = vst.msk [vmem:[%s118 + $0xe0] sm:$0xff] %vm344, %v340
      %374 = vst.msk [vmem:[%s118 + $0xe8] sm:$0xff] %vm344, %v341
      %375 = vst.msk [vmem:[%s118 + $0xf0] sm:$0xff] %vm344, %v342
      %376 = vst.msk [vmem:[%s118 + $0xf8] sm:$0xff] %vm344, %v343
      %v377 = vadd.f32 %v120, %v217
      %v378 = vadd.f32 %v121, %v219
      %v379 = vadd.f32 %v122, %v221
      %v380 = vadd.f32 %v123, %v223
      %v381 = vadd.f32 %v124, %v225
      %v382 = vadd.f32 %v125, %v227
      %v383 = vadd.f32 %v126, %v229
      %v384 = vadd.f32 %v127, %v231
      %v385 = vadd.f32 %v128, %v233
      %v386 = vadd.f32 %v129, %v235
      %v387 = vadd.f32 %v130, %v237
      %v388 = vadd.f32 %v131, %v239
      %v389 = vadd.f32 %v132, %v241
      %v390 = vadd.f32 %v133, %v243
      %v391 = vadd.f32 %v134, %v245
      %v392 = vadd.f32 %v135, %v247
      %v393 = vadd.f32 %v136, %v249
      %v394 = vadd.f32 %v137, %v251
      %v395 = vadd.f32 %v138, %v253
      %v396 = vadd.f32 %v139, %v255
      %v397 = vadd.f32 %v140, %v257
      %v398 = vadd.f32 %v141, %v259
      %v399 = vadd.f32 %v142, %v261
      %v400 = vadd.f32 %v143, %v263
      %v401 = vadd.f32 %v144, %v265
      %v402 = vadd.f32 %v145, %v267
      %v403 = vadd.f32 %v146, %v269
      %v404 = vadd.f32 %v147, %v271
      %v405 = vadd.f32 %v148, %v273
      %v406 = vadd.f32 %v149, %v275
      %v407 = vadd.f32 %v150, %v277
      %v408 = vadd.f32 %v151, %v279
      %441 = vrot.lane.b32.xlu0 %v377, 2
      %v442 = vpop.permute.xlu0 %441
      %443 = vrot.lane.b32.xlu0 %v378, 2
      %v444 = vpop.permute.xlu0 %443
      %445 = vrot.lane.b32.xlu0 %v379, 2
      %v446 = vpop.permute.xlu0 %445
      %447 = vrot.lane.b32.xlu0 %v380, 2
      %v448 = vpop.permute.xlu0 %447
      %449 = vrot.lane.b32.xlu0 %v381, 2
      %v450 = vpop.permute.xlu0 %449
      %451 = vrot.lane.b32.xlu0 %v382, 2
      %v452 = vpop.permute.xlu0 %451
      %453 = vrot.lane.b32.xlu0 %v383, 2
      %v454 = vpop.permute.xlu0 %453
      %455 = vrot.lane.b32.xlu0 %v384, 2
      %v456 = vpop.permute.xlu0 %455
      %457 = vrot.lane.b32.xlu0 %v385, 2
      %v458 = vpop.permute.xlu0 %457
      %459 = vrot.lane.b32.xlu0 %v386, 2
      %v460 = vpop.permute.xlu0 %459
      %461 = vrot.lane.b32.xlu0 %v387, 2
      %v462 = vpop.permute.xlu0 %461
      %463 = vrot.lane.b32.xlu0 %v388, 2
      %v464 = vpop.permute.xlu0 %463
      %465 = vrot.lane.b32.xlu0 %v389, 2
      %v466 = vpop.permute.xlu0 %465
      %467 = vrot.lane.b32.xlu0 %v390, 2
      %v468 = vpop.permute.xlu0 %467
      %469 = vrot.lane.b32.xlu0 %v391, 2
      %v470 = vpop.permute.xlu0 %469
      %471 = vrot.lane.b32.xlu0 %v392, 2
      %v472 = vpop.permute.xlu0 %471
      %473 = vrot.lane.b32.xlu0 %v393, 2
      %v474 = vpop.permute.xlu0 %473
      %475 = vrot.lane.b32.xlu0 %v394, 2
      %v476 = vpop.permute.xlu0 %475
      %477 = vrot.lane.b32.xlu0 %v395, 2
      %v478 = vpop.permute.xlu0 %477
      %479 = vrot.lane.b32.xlu0 %v396, 2
      %v480 = vpop.permute.xlu0 %479
      %481 = vrot.lane.b32.xlu0 %v397, 2
      %v482 = vpop.permute.xlu0 %481
      %483 = vrot.lane.b32.xlu0 %v398, 2
      %v484 = vpop.permute.xlu0 %483
      %485 = vrot.lane.b32.xlu0 %v399, 2
      %v486 = vpop.permute.xlu0 %485
      %487 = vrot.lane.b32.xlu0 %v400, 2
      %v488 = vpop.permute.xlu0 %487
      %489 = vrot.lane.b32.xlu0 %v401, 2
      %v490 = vpop.permute.xlu0 %489
      %491 = vrot.lane.b32.xlu0 %v402, 2
      %v492 = vpop.permute.xlu0 %491
      %493 = vrot.lane.b32.xlu0 %v403, 2
      %v494 = vpop.permute.xlu0 %493
      %495 = vrot.lane.b32.xlu0 %v404, 2
      %v496 = vpop.permute.xlu0 %495
      %497 = vrot.lane.b32.xlu0 %v405, 2
      %v498 = vpop.permute.xlu0 %497
      %499 = vrot.lane.b32.xlu0 %v406, 2
      %v500 = vpop.permute.xlu0 %499
      %501 = vrot.lane.b32.xlu0 %v407, 2
      %v502 = vpop.permute.xlu0 %501
      %503 = vrot.lane.b32.xlu0 %v408, 2
      %v504 = vpop.permute.xlu0 %503
      %vm537 = vcmask 31760
      %538 = vst.msk [vmem:[%s118] sm:$0xff] %vm537, %v442
      %539 = vst.msk [vmem:[%s118 + $0x8] sm:$0xff] %vm537, %v444
      %540 = vst.msk [vmem:[%s118 + $0x10] sm:$0xff] %vm537, %v446
      %541 = vst.msk [vmem:[%s118 + $0x18] sm:$0xff] %vm537, %v448
      %542 = vst.msk [vmem:[%s118 + $0x20] sm:$0xff] %vm537, %v450
      %543 = vst.msk [vmem:[%s118 + $0x28] sm:$0xff] %vm537, %v452
      %544 = vst.msk [vmem:[%s118 + $0x30] sm:$0xff] %vm537, %v454
      %545 = vst.msk [vmem:[%s118 + $0x38] sm:$0xff] %vm537, %v456
      %546 = vst.msk [vmem:[%s118 + $0x40] sm:$0xff] %vm537, %v458
      %547 = vst.msk [vmem:[%s118 + $0x48] sm:$0xff] %vm537, %v460
      %548 = vst.msk [vmem:[%s118 + $0x50] sm:$0xff] %vm537, %v462
      %549 = vst.msk [vmem:[%s118 + $0x58] sm:$0xff] %vm537, %v464
      %550 = vst.msk [vmem:[%s118 + $0x60] sm:$0xff] %vm537, %v466
      %551 = vst.msk [vmem:[%s118 + $0x68] sm:$0xff] %vm537, %v468
      %552 = vst.msk [vmem:[%s118 + $0x70] sm:$0xff] %vm537, %v470
      %553 = vst.msk [vmem:[%s118 + $0x78] sm:$0xff] %vm537, %v472
      %554 = vst.msk [vmem:[%s118 + $0x80] sm:$0xff] %vm537, %v474
      %555 = vst.msk [vmem:[%s118 + $0x88] sm:$0xff] %vm537, %v476
      %556 = vst.msk [vmem:[%s118 + $0x90] sm:$0xff] %vm537, %v478
      %557 = vst.msk [vmem:[%s118 + $0x98] sm:$0xff] %vm537, %v480
      %558 = vst.msk [vmem:[%s118 + $0xa0] sm:$0xff] %vm537, %v482
      %559 = vst.msk [vmem:[%s118 + $0xa8] sm:$0xff] %vm537, %v484
      %560 = vst.msk [vmem:[%s118 + $0xb0] sm:$0xff] %vm537, %v486
      %561 = vst.msk [vmem:[%s118 + $0xb8] sm:$0xff] %vm537, %v488
      %562 = vst.msk [vmem:[%s118 + $0xc0] sm:$0xff] %vm537, %v490
      %563 = vst.msk [vmem:[%s118 + $0xc8] sm:$0xff] %vm537, %v492
      %564 = vst.msk [vmem:[%s118 + $0xd0] sm:$0xff] %vm537, %v494
      %565 = vst.msk [vmem:[%s118 + $0xd8] sm:$0xff] %vm537, %v496
      %566 = vst.msk [vmem:[%s118 + $0xe0] sm:$0xff] %vm537, %v498
      %567 = vst.msk [vmem:[%s118 + $0xe8] sm:$0xff] %vm537, %v500
      %568 = vst.msk [vmem:[%s118 + $0xf0] sm:$0xff] %vm537, %v502
      %569 = vst.msk [vmem:[%s118 + $0xf8] sm:$0xff] %vm537, %v504
      %v570 = vlaneseq
      %v571 = vand.u32 %v570, 127
      %vm572 = vcmp.ge.s32.totalorder %v571, 5
      %574 = vset.pattern.permute.xlu0 4
      %575 = vperm.xlu0 %574, %v120
      %v576 = vpop.permute.xlu0 %575
      %579 = vset.pattern.permute.xlu0 4
      %580 = vperm.xlu0 %579, %v121
      %v581 = vpop.permute.xlu0 %580
      %584 = vset.pattern.permute.xlu0 4
      %585 = vperm.xlu0 %584, %v122
      %v586 = vpop.permute.xlu0 %585
      %589 = vset.pattern.permute.xlu0 4
      %590 = vperm.xlu0 %589, %v123
      %v591 = vpop.permute.xlu0 %590
      %594 = vset.pattern.permute.xlu0 4
      %595 = vperm.xlu0 %594, %v124
      %v596 = vpop.permute.xlu0 %595
      %599 = vset.pattern.permute.xlu0 4
      %600 = vperm.xlu0 %599, %v125
      %v601 = vpop.permute.xlu0 %600
      %604 = vset.pattern.permute.xlu0 4
      %605 = vperm.xlu0 %604, %v126
      %v606 = vpop.permute.xlu0 %605
      %609 = vset.pattern.permute.xlu0 4
      %610 = vperm.xlu0 %609, %v127
      %v611 = vpop.permute.xlu0 %610
      %614 = vset.pattern.permute.xlu0 4
      %615 = vperm.xlu0 %614, %v128
      %v616 = vpop.permute.xlu0 %615
      %619 = vset.pattern.permute.xlu0 4
      %620 = vperm.xlu0 %619, %v129
      %v621 = vpop.permute.xlu0 %620
      %624 = vset.pattern.permute.xlu0 4
      %625 = vperm.xlu0 %624, %v130
      %v626 = vpop.permute.xlu0 %625
      %629 = vset.pattern.permute.xlu0 4
      %630 = vperm.xlu0 %629, %v131
      %v631 = vpop.permute.xlu0 %630
      %634 = vset.pattern.permute.xlu0 4
      %635 = vperm.xlu0 %634, %v132
      %v636 = vpop.permute.xlu0 %635
      %639 = vset.pattern.permute.xlu0 4
      %640 = vperm.xlu0 %639, %v133
      %v641 = vpop.permute.xlu0 %640
      %644 = vset.pattern.permute.xlu0 4
      %645 = vperm.xlu0 %644, %v134
      %v646 = vpop.permute.xlu0 %645
      %649 = vset.pattern.permute.xlu0 4
      %650 = vperm.xlu0 %649, %v135
      %v651 = vpop.permute.xlu0 %650
      %654 = vset.pattern.permute.xlu0 4
      %655 = vperm.xlu0 %654, %v136
      %v656 = vpop.permute.xlu0 %655
      %659 = vset.pattern.permute.xlu0 4
      %660 = vperm.xlu0 %659, %v137
      %v661 = vpop.permute.xlu0 %660
      %664 = vset.pattern.permute.xlu0 4
      %665 = vperm.xlu0 %664, %v138
      %v666 = vpop.permute.xlu0 %665
      %669 = vset.pattern.permute.xlu0 4
      %670 = vperm.xlu0 %669, %v139
      %v671 = vpop.permute.xlu0 %670
      %674 = vset.pattern.permute.xlu0 4
      %675 = vperm.xlu0 %674, %v140
      %v676 = vpop.permute.xlu0 %675
      %679 = vset.pattern.permute.xlu0 4
      %680 = vperm.xlu0 %679, %v141
      %v681 = vpop.permute.xlu0 %680
      %684 = vset.pattern.permute.xlu0 4
      %685 = vperm.xlu0 %684, %v142
      %v686 = vpop.permute.xlu0 %685
      %689 = vset.pattern.permute.xlu0 4
      %690 = vperm.xlu0 %689, %v143
      %v691 = vpop.permute.xlu0 %690
      %694 = vset.pattern.permute.xlu0 4
      %695 = vperm.xlu0 %694, %v144
      %v696 = vpop.permute.xlu0 %695
      %699 = vset.pattern.permute.xlu0 4
      %700 = vperm.xlu0 %699, %v145
      %v701 = vpop.permute.xlu0 %700
      %704 = vset.pattern.permute.xlu0 4
      %705 = vperm.xlu0 %704, %v146
      %v706 = vpop.permute.xlu0 %705
      %709 = vset.pattern.permute.xlu0 4
      %710 = vperm.xlu0 %709, %v147
      %v711 = vpop.permute.xlu0 %710
      %714 = vset.pattern.permute.xlu0 4
      %715 = vperm.xlu0 %714, %v148
      %v716 = vpop.permute.xlu0 %715
      %719 = vset.pattern.permute.xlu0 4
      %720 = vperm.xlu0 %719, %v149
      %v721 = vpop.permute.xlu0 %720
      %724 = vset.pattern.permute.xlu0 4
      %725 = vperm.xlu0 %724, %v150
      %v726 = vpop.permute.xlu0 %725
      %729 = vset.pattern.permute.xlu0 4
      %730 = vperm.xlu0 %729, %v151
      %v731 = vpop.permute.xlu0 %730
      %v733 = vmul.f32 %v120, %v576
      %v734 = vmul.f32 %v121, %v581
      %v735 = vmul.f32 %v122, %v586
      %v736 = vmul.f32 %v123, %v591
      %v737 = vmul.f32 %v124, %v596
      %v738 = vmul.f32 %v125, %v601
      %v739 = vmul.f32 %v126, %v606
      %v740 = vmul.f32 %v127, %v611
      %v741 = vmul.f32 %v128, %v616
      %v742 = vmul.f32 %v129, %v621
      %v743 = vmul.f32 %v130, %v626
      %v744 = vmul.f32 %v131, %v631
      %v745 = vmul.f32 %v132, %v636
      %v746 = vmul.f32 %v133, %v641
      %v747 = vmul.f32 %v134, %v646
      %v748 = vmul.f32 %v135, %v651
      %v749 = vmul.f32 %v136, %v656
      %v750 = vmul.f32 %v137, %v661
      %v751 = vmul.f32 %v138, %v666
      %v752 = vmul.f32 %v139, %v671
      %v753 = vmul.f32 %v140, %v676
      %v754 = vmul.f32 %v141, %v681
      %v755 = vmul.f32 %v142, %v686
      %v756 = vmul.f32 %v143, %v691
      %v757 = vmul.f32 %v144, %v696
      %v758 = vmul.f32 %v145, %v701
      %v759 = vmul.f32 %v146, %v706
      %v760 = vmul.f32 %v147, %v711
      %v761 = vmul.f32 %v148, %v716
      %v762 = vmul.f32 %v149, %v721
      %v763 = vmul.f32 %v150, %v726
      %v764 = vmul.f32 %v151, %v731
      %v765 = vsel %vm572, %v733, -inf
      %v766 = vsel %vm572, %v734, -inf
      %v767 = vsel %vm572, %v735, -inf
      %v768 = vsel %vm572, %v736, -inf
      %v769 = vsel %vm572, %v737, -inf
      %v770 = vsel %vm572, %v738, -inf
      %v771 = vsel %vm572, %v739, -inf
      %v772 = vsel %vm572, %v740, -inf
      %v773 = vsel %vm572, %v741, -inf
      %v774 = vsel %vm572, %v742, -inf
      %v775 = vsel %vm572, %v743, -inf
      %v776 = vsel %vm572, %v744, -inf
      %v777 = vsel %vm572, %v745, -inf
      %v778 = vsel %vm572, %v746, -inf
      %v779 = vsel %vm572, %v747, -inf
      %v780 = vsel %vm572, %v748, -inf
      %v781 = vsel %vm572, %v749, -inf
      %v782 = vsel %vm572, %v750, -inf
      %v783 = vsel %vm572, %v751, -inf
      %v784 = vsel %vm572, %v752, -inf
      %v785 = vsel %vm572, %v753, -inf
      %v786 = vsel %vm572, %v754, -inf
      %v787 = vsel %vm572, %v755, -inf
      %v788 = vsel %vm572, %v756, -inf
      %v789 = vsel %vm572, %v757, -inf
      %v790 = vsel %vm572, %v758, -inf
      %v791 = vsel %vm572, %v759, -inf
      %v792 = vsel %vm572, %v760, -inf
      %v793 = vsel %vm572, %v761, -inf
      %v794 = vsel %vm572, %v762, -inf
      %v795 = vsel %vm572, %v763, -inf
      %v796 = vsel %vm572, %v764, -inf
      %vm797 = vcmask 695296
      %v798 = vsel %vm797, %v765, -inf
      %799 = vmax.xlane.f32.xlu0 %v798
      %v800 = vpop.xlane.xlu0 %799
      %v801 = vsel %vm797, %v766, -inf
      %802 = vmax.xlane.f32.xlu0 %v801
      %v803 = vpop.xlane.xlu0 %802
      %v804 = vsel %vm797, %v767, -inf
      %805 = vmax.xlane.f32.xlu0 %v804
      %v806 = vpop.xlane.xlu0 %805
      %v807 = vsel %vm797, %v768, -inf
      %808 = vmax.xlane.f32.xlu0 %v807
      %v809 = vpop.xlane.xlu0 %808
      %v810 = vsel %vm797, %v769, -inf
      %811 = vmax.xlane.f32.xlu0 %v810
      %v812 = vpop.xlane.xlu0 %811
      %v813 = vsel %vm797, %v770, -inf
      %814 = vmax.xlane.f32.xlu0 %v813
      %v815 = vpop.xlane.xlu0 %814
      %v816 = vsel %vm797, %v771, -inf
      %817 = vmax.xlane.f32.xlu0 %v816
      %v818 = vpop.xlane.xlu0 %817
      %v819 = vsel %vm797, %v772, -inf
      %820 = vmax.xlane.f32.xlu0 %v819
      %v821 = vpop.xlane.xlu0 %820
      %v822 = vsel %vm797, %v773, -inf
      %823 = vmax.xlane.f32.xlu0 %v822
      %v824 = vpop.xlane.xlu0 %823
      %v825 = vsel %vm797, %v774, -inf
      %826 = vmax.xlane.f32.xlu0 %v825
      %v827 = vpop.xlane.xlu0 %826
      %v828 = vsel %vm797, %v775, -inf
      %829 = vmax.xlane.f32.xlu0 %v828
      %v830 = vpop.xlane.xlu0 %829
      %v831 = vsel %vm797, %v776, -inf
      %832 = vmax.xlane.f32.xlu0 %v831
      %v833 = vpop.xlane.xlu0 %832
      %v834 = vsel %vm797, %v777, -inf
      %835 = vmax.xlane.f32.xlu0 %v834
      %v836 = vpop.xlane.xlu0 %835
      %v837 = vsel %vm797, %v778, -inf
      %838 = vmax.xlane.f32.xlu0 %v837
      %v839 = vpop.xlane.xlu0 %838
      %v840 = vsel %vm797, %v779, -inf
      %841 = vmax.xlane.f32.xlu0 %v840
      %v842 = vpop.xlane.xlu0 %841
      %v843 = vsel %vm797, %v780, -inf
      %844 = vmax.xlane.f32.xlu0 %v843
      %v845 = vpop.xlane.xlu0 %844
      %v846 = vsel %vm797, %v781, -inf
      %847 = vmax.xlane.f32.xlu0 %v846
      %v848 = vpop.xlane.xlu0 %847
      %v849 = vsel %vm797, %v782, -inf
      %850 = vmax.xlane.f32.xlu0 %v849
      %v851 = vpop.xlane.xlu0 %850
      %v852 = vsel %vm797, %v783, -inf
      %853 = vmax.xlane.f32.xlu0 %v852
      %v854 = vpop.xlane.xlu0 %853
      %v855 = vsel %vm797, %v784, -inf
      %856 = vmax.xlane.f32.xlu0 %v855
      %v857 = vpop.xlane.xlu0 %856
      %v858 = vsel %vm797, %v785, -inf
      %859 = vmax.xlane.f32.xlu0 %v858
      %v860 = vpop.xlane.xlu0 %859
      %v861 = vsel %vm797, %v786, -inf
      %862 = vmax.xlane.f32.xlu0 %v861
      %v863 = vpop.xlane.xlu0 %862
      %v864 = vsel %vm797, %v787, -inf
      %865 = vmax.xlane.f32.xlu0 %v864
      %v866 = vpop.xlane.xlu0 %865
      %v867 = vsel %vm797, %v788, -inf
      %868 = vmax.xlane.f32.xlu0 %v867
      %v869 = vpop.xlane.xlu0 %868
      %v870 = vsel %vm797, %v789, -inf
      %871 = vmax.xlane.f32.xlu0 %v870
      %v872 = vpop.xlane.xlu0 %871
      %v873 = vsel %vm797, %v790, -inf
      %874 = vmax.xlane.f32.xlu0 %v873
      %v875 = vpop.xlane.xlu0 %874
      %v876 = vsel %vm797, %v791, -inf
      %877 = vmax.xlane.f32.xlu0 %v876
      %v878 = vpop.xlane.xlu0 %877
      %v879 = vsel %vm797, %v792, -inf
      %880 = vmax.xlane.f32.xlu0 %v879
      %v881 = vpop.xlane.xlu0 %880
      %v882 = vsel %vm797, %v793, -inf
      %883 = vmax.xlane.f32.xlu0 %v882
      %v884 = vpop.xlane.xlu0 %883
      %v885 = vsel %vm797, %v794, -inf
      %886 = vmax.xlane.f32.xlu0 %v885
      %v887 = vpop.xlane.xlu0 %886
      %v888 = vsel %vm797, %v795, -inf
      %889 = vmax.xlane.f32.xlu0 %v888
      %v890 = vpop.xlane.xlu0 %889
      %v891 = vsel %vm797, %v796, -inf
      %892 = vmax.xlane.f32.xlu0 %v891
      %v893 = vpop.xlane.xlu0 %892
      %v894 = vcvt.s32.f32 %v571
      %vm895 = vcmp.eq.f32.partialorder %v765, %v800
      %vm896 = vcmp.eq.f32.partialorder %v766, %v803
      %vm897 = vcmp.eq.f32.partialorder %v767, %v806
      %vm898 = vcmp.eq.f32.partialorder %v768, %v809
      %vm899 = vcmp.eq.f32.partialorder %v769, %v812
      %vm900 = vcmp.eq.f32.partialorder %v770, %v815
      %vm901 = vcmp.eq.f32.partialorder %v771, %v818
      %vm902 = vcmp.eq.f32.partialorder %v772, %v821
      %vm903 = vcmp.eq.f32.partialorder %v773, %v824
      %vm904 = vcmp.eq.f32.partialorder %v774, %v827
      %vm905 = vcmp.eq.f32.partialorder %v775, %v830
      %vm906 = vcmp.eq.f32.partialorder %v776, %v833
      %vm907 = vcmp.eq.f32.partialorder %v777, %v836
      %vm908 = vcmp.eq.f32.partialorder %v778, %v839
      %vm909 = vcmp.eq.f32.partialorder %v779, %v842
      %vm910 = vcmp.eq.f32.partialorder %v780, %v845
      %vm911 = vcmp.eq.f32.partialorder %v781, %v848
      %vm912 = vcmp.eq.f32.partialorder %v782, %v851
      %vm913 = vcmp.eq.f32.partialorder %v783, %v854
      %vm914 = vcmp.eq.f32.partialorder %v784, %v857
      %vm915 = vcmp.eq.f32.partialorder %v785, %v860
      %vm916 = vcmp.eq.f32.partialorder %v786, %v863
      %vm917 = vcmp.eq.f32.partialorder %v787, %v866
      %vm918 = vcmp.eq.f32.partialorder %v788, %v869
      %vm919 = vcmp.eq.f32.partialorder %v789, %v872
      %vm920 = vcmp.eq.f32.partialorder %v790, %v875
      %vm921 = vcmp.eq.f32.partialorder %v791, %v878
      %vm922 = vcmp.eq.f32.partialorder %v792, %v881
      %vm923 = vcmp.eq.f32.partialorder %v793, %v884
      %vm924 = vcmp.eq.f32.partialorder %v794, %v887
      %vm925 = vcmp.eq.f32.partialorder %v795, %v890
      %vm926 = vcmp.eq.f32.partialorder %v796, %v893
      %v927 = vsel %vm895, %v894, 85.0
      %v928 = vsel %vm896, %v894, 85.0
      %v929 = vsel %vm897, %v894, 85.0
      %v930 = vsel %vm898, %v894, 85.0
      %v931 = vsel %vm899, %v894, 85.0
      %v932 = vsel %vm900, %v894, 85.0
      %v933 = vsel %vm901, %v894, 85.0
      %v934 = vsel %vm902, %v894, 85.0
      %v935 = vsel %vm903, %v894, 85.0
      %v936 = vsel %vm904, %v894, 85.0
      %v937 = vsel %vm905, %v894, 85.0
      %v938 = vsel %vm906, %v894, 85.0
      %v939 = vsel %vm907, %v894, 85.0
      %v940 = vsel %vm908, %v894, 85.0
      %v941 = vsel %vm909, %v894, 85.0
      %v942 = vsel %vm910, %v894, 85.0
      %v943 = vsel %vm911, %v894, 85.0
      %v944 = vsel %vm912, %v894, 85.0
      %v945 = vsel %vm913, %v894, 85.0
      %v946 = vsel %vm914, %v894, 85.0
      %v947 = vsel %vm915, %v894, 85.0
      %v948 = vsel %vm916, %v894, 85.0
      %v949 = vsel %vm917, %v894, 85.0
      %v950 = vsel %vm918, %v894, 85.0
      %v951 = vsel %vm919, %v894, 85.0
      %v952 = vsel %vm920, %v894, 85.0
      %v953 = vsel %vm921, %v894, 85.0
      %v954 = vsel %vm922, %v894, 85.0
      %v955 = vsel %vm923, %v894, 85.0
      %v956 = vsel %vm924, %v894, 85.0
      %v957 = vsel %vm925, %v894, 85.0
      %v958 = vsel %vm926, %v894, 85.0
      %v959 = vsel %vm797, %v927, inf
      %960 = vmin.xlane.f32.xlu0 %v959
      %v961 = vpop.xlane.xlu0 %960
      %v962 = vsel %vm797, %v928, inf
      %963 = vmin.xlane.f32.xlu0 %v962
      %v964 = vpop.xlane.xlu0 %963
      %v965 = vsel %vm797, %v929, inf
      %966 = vmin.xlane.f32.xlu0 %v965
      %v967 = vpop.xlane.xlu0 %966
      %v968 = vsel %vm797, %v930, inf
      %969 = vmin.xlane.f32.xlu0 %v968
      %v970 = vpop.xlane.xlu0 %969
      %v971 = vsel %vm797, %v931, inf
      %972 = vmin.xlane.f32.xlu0 %v971
      %v973 = vpop.xlane.xlu0 %972
      %v974 = vsel %vm797, %v932, inf
      %975 = vmin.xlane.f32.xlu0 %v974
      %v976 = vpop.xlane.xlu0 %975
      %v977 = vsel %vm797, %v933, inf
      %978 = vmin.xlane.f32.xlu0 %v977
      %v979 = vpop.xlane.xlu0 %978
      %v980 = vsel %vm797, %v934, inf
      %981 = vmin.xlane.f32.xlu0 %v980
      %v982 = vpop.xlane.xlu0 %981
      %v983 = vsel %vm797, %v935, inf
      %984 = vmin.xlane.f32.xlu0 %v983
      %v985 = vpop.xlane.xlu0 %984
      %v986 = vsel %vm797, %v936, inf
      %987 = vmin.xlane.f32.xlu0 %v986
      %v988 = vpop.xlane.xlu0 %987
      %v989 = vsel %vm797, %v937, inf
      %990 = vmin.xlane.f32.xlu0 %v989
      %v991 = vpop.xlane.xlu0 %990
      %v992 = vsel %vm797, %v938, inf
      %993 = vmin.xlane.f32.xlu0 %v992
      %v994 = vpop.xlane.xlu0 %993
      %v995 = vsel %vm797, %v939, inf
      %996 = vmin.xlane.f32.xlu0 %v995
      %v997 = vpop.xlane.xlu0 %996
      %v998 = vsel %vm797, %v940, inf
      %999 = vmin.xlane.f32.xlu0 %v998
      %v1000 = vpop.xlane.xlu0 %999
      %v1001 = vsel %vm797, %v941, inf
      %1002 = vmin.xlane.f32.xlu0 %v1001
      %v1003 = vpop.xlane.xlu0 %1002
      %v1004 = vsel %vm797, %v942, inf
      %1005 = vmin.xlane.f32.xlu0 %v1004
      %v1006 = vpop.xlane.xlu0 %1005
      %v1007 = vsel %vm797, %v943, inf
      %1008 = vmin.xlane.f32.xlu0 %v1007
      %v1009 = vpop.xlane.xlu0 %1008
      %v1010 = vsel %vm797, %v944, inf
      %1011 = vmin.xlane.f32.xlu0 %v1010
      %v1012 = vpop.xlane.xlu0 %1011
      %v1013 = vsel %vm797, %v945, inf
      %1014 = vmin.xlane.f32.xlu0 %v1013
      %v1015 = vpop.xlane.xlu0 %1014
      %v1016 = vsel %vm797, %v946, inf
      %1017 = vmin.xlane.f32.xlu0 %v1016
      %v1018 = vpop.xlane.xlu0 %1017
      %v1019 = vsel %vm797, %v947, inf
      %1020 = vmin.xlane.f32.xlu0 %v1019
      %v1021 = vpop.xlane.xlu0 %1020
      %v1022 = vsel %vm797, %v948, inf
      %1023 = vmin.xlane.f32.xlu0 %v1022
      %v1024 = vpop.xlane.xlu0 %1023
      %v1025 = vsel %vm797, %v949, inf
      %1026 = vmin.xlane.f32.xlu0 %v1025
      %v1027 = vpop.xlane.xlu0 %1026
      %v1028 = vsel %vm797, %v950, inf
      %1029 = vmin.xlane.f32.xlu0 %v1028
      %v1030 = vpop.xlane.xlu0 %1029
      %v1031 = vsel %vm797, %v951, inf
      %1032 = vmin.xlane.f32.xlu0 %v1031
      %v1033 = vpop.xlane.xlu0 %1032
      %v1034 = vsel %vm797, %v952, inf
      %1035 = vmin.xlane.f32.xlu0 %v1034
      %v1036 = vpop.xlane.xlu0 %1035
      %v1037 = vsel %vm797, %v953, inf
      %1038 = vmin.xlane.f32.xlu0 %v1037
      %v1039 = vpop.xlane.xlu0 %1038
      %v1040 = vsel %vm797, %v954, inf
      %1041 = vmin.xlane.f32.xlu0 %v1040
      %v1042 = vpop.xlane.xlu0 %1041
      %v1043 = vsel %vm797, %v955, inf
      %1044 = vmin.xlane.f32.xlu0 %v1043
      %v1045 = vpop.xlane.xlu0 %1044
      %v1046 = vsel %vm797, %v956, inf
      %1047 = vmin.xlane.f32.xlu0 %v1046
      %v1048 = vpop.xlane.xlu0 %1047
      %v1049 = vsel %vm797, %v957, inf
      %1050 = vmin.xlane.f32.xlu0 %v1049
      %v1051 = vpop.xlane.xlu0 %1050
      %v1052 = vsel %vm797, %v958, inf
      %1053 = vmin.xlane.f32.xlu0 %v1052
      %v1054 = vpop.xlane.xlu0 %1053
      %v1055 = vsub.f32 %v961, 5.0
      %v1056 = vsub.f32 %v964, 5.0
      %v1057 = vsub.f32 %v967, 5.0
      %v1058 = vsub.f32 %v970, 5.0
      %v1059 = vsub.f32 %v973, 5.0
      %v1060 = vsub.f32 %v976, 5.0
      %v1061 = vsub.f32 %v979, 5.0
      %v1062 = vsub.f32 %v982, 5.0
      %v1063 = vsub.f32 %v985, 5.0
      %v1064 = vsub.f32 %v988, 5.0
      %v1065 = vsub.f32 %v991, 5.0
      %v1066 = vsub.f32 %v994, 5.0
      %v1067 = vsub.f32 %v997, 5.0
      %v1068 = vsub.f32 %v1000, 5.0
      %v1069 = vsub.f32 %v1003, 5.0
      %v1070 = vsub.f32 %v1006, 5.0
      %v1071 = vsub.f32 %v1009, 5.0
      %v1072 = vsub.f32 %v1012, 5.0
      %v1073 = vsub.f32 %v1015, 5.0
      %v1074 = vsub.f32 %v1018, 5.0
      %v1075 = vsub.f32 %v1021, 5.0
      %v1076 = vsub.f32 %v1024, 5.0
      %v1077 = vsub.f32 %v1027, 5.0
      %v1078 = vsub.f32 %v1030, 5.0
      %v1079 = vsub.f32 %v1033, 5.0
      %v1080 = vsub.f32 %v1036, 5.0
      %v1081 = vsub.f32 %v1039, 5.0
      %v1082 = vsub.f32 %v1042, 5.0
      %v1083 = vsub.f32 %v1045, 5.0
      %v1084 = vsub.f32 %v1048, 5.0
      %v1085 = vsub.f32 %v1051, 5.0
      %v1086 = vsub.f32 %v1054, 5.0
      %vm1087 = vcmask 39968
      %1088 = vst.msk [vmem:[%s118] sm:$0xff] %vm1087, %v800
      %1089 = vst.msk [vmem:[%s118 + $0x8] sm:$0xff] %vm1087, %v803
      %1090 = vst.msk [vmem:[%s118 + $0x10] sm:$0xff] %vm1087, %v806
      %1091 = vst.msk [vmem:[%s118 + $0x18] sm:$0xff] %vm1087, %v809
      %1092 = vst.msk [vmem:[%s118 + $0x20] sm:$0xff] %vm1087, %v812
      %1093 = vst.msk [vmem:[%s118 + $0x28] sm:$0xff] %vm1087, %v815
      %1094 = vst.msk [vmem:[%s118 + $0x30] sm:$0xff] %vm1087, %v818
      %1095 = vst.msk [vmem:[%s118 + $0x38] sm:$0xff] %vm1087, %v821
      %1096 = vst.msk [vmem:[%s118 + $0x40] sm:$0xff] %vm1087, %v824
      %1097 = vst.msk [vmem:[%s118 + $0x48] sm:$0xff] %vm1087, %v827
      %1098 = vst.msk [vmem:[%s118 + $0x50] sm:$0xff] %vm1087, %v830
      %1099 = vst.msk [vmem:[%s118 + $0x58] sm:$0xff] %vm1087, %v833
      %1100 = vst.msk [vmem:[%s118 + $0x60] sm:$0xff] %vm1087, %v836
      %1101 = vst.msk [vmem:[%s118 + $0x68] sm:$0xff] %vm1087, %v839
      %1102 = vst.msk [vmem:[%s118 + $0x70] sm:$0xff] %vm1087, %v842
      %1103 = vst.msk [vmem:[%s118 + $0x78] sm:$0xff] %vm1087, %v845
      %1104 = vst.msk [vmem:[%s118 + $0x80] sm:$0xff] %vm1087, %v848
      %1105 = vst.msk [vmem:[%s118 + $0x88] sm:$0xff] %vm1087, %v851
      %1106 = vst.msk [vmem:[%s118 + $0x90] sm:$0xff] %vm1087, %v854
      %1107 = vst.msk [vmem:[%s118 + $0x98] sm:$0xff] %vm1087, %v857
      %1108 = vst.msk [vmem:[%s118 + $0xa0] sm:$0xff] %vm1087, %v860
      %1109 = vst.msk [vmem:[%s118 + $0xa8] sm:$0xff] %vm1087, %v863
      %1110 = vst.msk [vmem:[%s118 + $0xb0] sm:$0xff] %vm1087, %v866
      %1111 = vst.msk [vmem:[%s118 + $0xb8] sm:$0xff] %vm1087, %v869
      %1112 = vst.msk [vmem:[%s118 + $0xc0] sm:$0xff] %vm1087, %v872
      %1113 = vst.msk [vmem:[%s118 + $0xc8] sm:$0xff] %vm1087, %v875
      %1114 = vst.msk [vmem:[%s118 + $0xd0] sm:$0xff] %vm1087, %v878
      %1115 = vst.msk [vmem:[%s118 + $0xd8] sm:$0xff] %vm1087, %v881
      %1116 = vst.msk [vmem:[%s118 + $0xe0] sm:$0xff] %vm1087, %v884
      %1117 = vst.msk [vmem:[%s118 + $0xe8] sm:$0xff] %vm1087, %v887
      %1118 = vst.msk [vmem:[%s118 + $0xf0] sm:$0xff] %vm1087, %v890
      %1119 = vst.msk [vmem:[%s118 + $0xf8] sm:$0xff] %vm1087, %v893
      %vm1120 = vcmask 48168
      %1121 = vst.msk [vmem:[%s118] sm:$0xff] %vm1120, %v1055
      %1122 = vst.msk [vmem:[%s118 + $0x8] sm:$0xff] %vm1120, %v1056
      %1123 = vst.msk [vmem:[%s118 + $0x10] sm:$0xff] %vm1120, %v1057
      %1124 = vst.msk [vmem:[%s118 + $0x18] sm:$0xff] %vm1120, %v1058
      %1125 = vst.msk [vmem:[%s118 + $0x20] sm:$0xff] %vm1120, %v1059
      %1126 = vst.msk [vmem:[%s118 + $0x28] sm:$0xff] %vm1120, %v1060
      %1127 = vst.msk [vmem:[%s118 + $0x30] sm:$0xff] %vm1120, %v1061
      %1128 = vst.msk [vmem:[%s118 + $0x38] sm:$0xff] %vm1120, %v1062
      %1129 = vst.msk [vmem:[%s118 + $0x40] sm:$0xff] %vm1120, %v1063
      %1130 = vst.msk [vmem:[%s118 + $0x48] sm:$0xff] %vm1120, %v1064
      %1131 = vst.msk [vmem:[%s118 + $0x50] sm:$0xff] %vm1120, %v1065
      %1132 = vst.msk [vmem:[%s118 + $0x58] sm:$0xff] %vm1120, %v1066
      %1133 = vst.msk [vmem:[%s118 + $0x60] sm:$0xff] %vm1120, %v1067
      %1134 = vst.msk [vmem:[%s118 + $0x68] sm:$0xff] %vm1120, %v1068
      %1135 = vst.msk [vmem:[%s118 + $0x70] sm:$0xff] %vm1120, %v1069
      %1136 = vst.msk [vmem:[%s118 + $0x78] sm:$0xff] %vm1120, %v1070
      %1137 = vst.msk [vmem:[%s118 + $0x80] sm:$0xff] %vm1120, %v1071
      %1138 = vst.msk [vmem:[%s118 + $0x88] sm:$0xff] %vm1120, %v1072
      %1139 = vst.msk [vmem:[%s118 + $0x90] sm:$0xff] %vm1120, %v1073
      %1140 = vst.msk [vmem:[%s118 + $0x98] sm:$0xff] %vm1120, %v1074
      %1141 = vst.msk [vmem:[%s118 + $0xa0] sm:$0xff] %vm1120, %v1075
      %1142 = vst.msk [vmem:[%s118 + $0xa8] sm:$0xff] %vm1120, %v1076
      %1143 = vst.msk [vmem:[%s118 + $0xb0] sm:$0xff] %vm1120, %v1077
      %1144 = vst.msk [vmem:[%s118 + $0xb8] sm:$0xff] %vm1120, %v1078
      %1145 = vst.msk [vmem:[%s118 + $0xc0] sm:$0xff] %vm1120, %v1079
      %1146 = vst.msk [vmem:[%s118 + $0xc8] sm:$0xff] %vm1120, %v1080
      %1147 = vst.msk [vmem:[%s118 + $0xd0] sm:$0xff] %vm1120, %v1081
      %1148 = vst.msk [vmem:[%s118 + $0xd8] sm:$0xff] %vm1120, %v1082
      %1149 = vst.msk [vmem:[%s118 + $0xe0] sm:$0xff] %vm1120, %v1083
      %1150 = vst.msk [vmem:[%s118 + $0xe8] sm:$0xff] %vm1120, %v1084
      %1151 = vst.msk [vmem:[%s118 + $0xf0] sm:$0xff] %vm1120, %v1085
      %1152 = vst.msk [vmem:[%s118 + $0xf8] sm:$0xff] %vm1120, %v1086
      %s1153 = smul.u32 32, %s12
      %p1154 = scmp.lt.s32.totalorder %s1153, 63
      %s1155 = scalar_select %p1154, %s1153, 63
      %s1156 = smul.addr %s1155, 8
      %s1157 = scalar_lea.vmem %s1, %s1156
      // Predicated region
      $region25: #{tpu_custom_call.1} parent=23 // pred_check
        %p1158 = pneg %p56
      $region26: #{tpu_custom_call.1} parent=23 // pred_check_branch
        %1160 = sbr.rel (%p1158) target = $region28
      $region27: #{tpu_custom_call.1} parent=23 // pred_region
        %s1161 = smul.u32 32, %s12
      $region28: #{tpu_custom_call.1} parent=23 // pred_fallthru
        _
    $region24: #{tpu_custom_call.1} parent=5 // pred_fallthru
      _
    %p1162 = scmp.le.s32.totalorder 2, %s7
    // Predicated region
    $region29: #{tpu_custom_call.1} parent=5 // pred_check
      %p1163 = pneg %p1162
    $region30: #{tpu_custom_call.1} parent=5 // pred_check_branch
      %1165 = sbr.rel (%p1163) target = $region32
    $region31: #{tpu_custom_call.1} parent=5 // pred_region
      %s1166 = ssub.s32 %s7, 2
      // Predicated region
      $region33: #{tpu_custom_call.1} parent=31 // pred_check
        %p1167 = pneg %p62
      $region34: #{tpu_custom_call.1} parent=31 // pred_check_branch
        %1169 = sbr.rel (%p1167) target = $region36
      $region35: #{tpu_custom_call.1} parent=31 // pred_region
        %s1170 = smul.u32 32, %s13
        %p1171 = scmp.lt.s32.totalorder %s1170, 63
        %s1172 = scalar_select %p1171, %s1170, 63
        %s1173 = smul.addr %s1172, 8
        %s1174 = scalar_lea.vmem %s1, %s1173
      $region36: #{tpu_custom_call.1} parent=31 // pred_fallthru
        _
    $region32: #{tpu_custom_call.1} parent=5 // pred_fallthru
      _
  $region6: #{tpu_custom_call.1} parent=0 // loop_footer
    %s11 = sadd.s32 1, %s7
  $region7: #{tpu_custom_call.1} parent=0 // loop_footer_branch
    %6 = sbr.rel target = $region3
  $region8: #{tpu_custom_call.1} parent=0 // loop_exit
    _

</llo_original>
